<compile_context>
chip_gen: v6e
topology: v6e:2x2x1
jax: 0.10.0
libtpu: 0.0.40
codegen_flags: <defaults>
</compile_context>

<pallas_src>
import functools

import jax
import jax.numpy as jnp
from jax.experimental import pallas as pl
from jax.experimental.pallas import tpu as pltpu


# ---------------------------------------------------------------------------
# Kernel
# ---------------------------------------------------------------------------
def _mlp_kernel(x_ref, w1g_ref, b1g_ref, w2_ref, b2_ref, w4_ref, b4_ref, o_ref,
                *, hidden):
    # In-kernel bf16 cast of activations for the MXU.
    x = x_ref[...].astype(jnp.bfloat16)                          # [TB, D]

    # Fused fc1 | fcG : one MXU push, 2H lanes wide, f32 accumulation.
    l1g = jnp.dot(x, w1g_ref[...],
                  preferred_element_type=jnp.float32) + b1g_ref[...]  # [TB, 2H] f32
    l1 = l1g[:, :hidden]                                         # fc1 pre-act
    lg = l1g[:, hidden:]                                         # fcG pre-act

    h1 = jnp.maximum(l1, 0.0)                                    # relu  (VPU, f32)
    g = jax.nn.sigmoid(lg)                                       # gate  (EUP, f32)

    # fc2 -> relu
    l2 = jnp.dot(h1.astype(jnp.bfloat16), w2_ref[...],
                 preferred_element_type=jnp.float32) + b2_ref[...]    # [TB, H] f32
    h2 = jnp.maximum(l2, 0.0)

    h2_g = g * h2                                                # gated hidden (f32)

    # fc4, scaled by C_out = 1.0
    c_out = 1.0
    out = jnp.dot(h2_g.astype(jnp.bfloat16), w4_ref[...],
                  preferred_element_type=jnp.float32) + b4_ref[...]   # [TB, 2] f32
    o_ref[...] = (c_out * out).astype(o_ref.dtype)


# ---------------------------------------------------------------------------
# Wrapper
# ---------------------------------------------------------------------------
def neural_network_model(x, packed, *, block_rows=512):
    """Forward pass of NeuralNetworkModel as a single gridded Pallas kernel.

    x:      [B, num_inputs] float32 (cast to bf16 inside the kernel).
    packed: dict from pack_params(): w1g [D, 2H] bf16, b1g [1, 2H] f32,
            w2 [H, H] bf16, b2 [1, H] f32, w4 [H, 2] bf16, b4 [1, 2] f32.
    """
    B, D = x.shape
    H = packed["w2"].shape[0]

    # Batch tile: whole batch if it fits one tile, else a sublane-aligned tile
    # (block_rows is a multiple of 8; partial last tiles are handled by Pallas).
    TB = B if B <= block_rows else block_rows
    grid = (pl.cdiv(B, TB),)

    x_spec = pl.BlockSpec((TB, D), lambda i: (i, 0))
    out_spec = pl.BlockSpec((TB, 2), lambda i: (i, 0))

    def resident(arr):
        # Full-shape block, same block index every grid step -> stays in VMEM.
        return pl.BlockSpec(arr.shape, lambda i: (0, 0))

    weight_args = (packed["w1g"], packed["b1g"],
                   packed["w2"], packed["b2"],
                   packed["w4"], packed["b4"])

    bf16_bytes, f32_bytes = 2, 4
    weight_bytes = sum(
        int(w.size) * (bf16_bytes if w.dtype == jnp.bfloat16 else f32_bytes)
        for w in weight_args)
    cost = pl.CostEstimate(
        flops=B * (2 * D * (2 * H) + 2 * H * H + 2 * H * 2),
        transcendentals=B * H,                          # sigmoid gate
        bytes_accessed=B * D * f32_bytes + B * 2 * f32_bytes + weight_bytes,
    )

    return pl.pallas_call(
        functools.partial(_mlp_kernel, hidden=H),
        out_shape=jax.ShapeDtypeStruct((B, 2), jnp.float32),
        grid=grid,
        in_specs=[x_spec] + [resident(w) for w in weight_args],
        out_specs=out_spec,
        compiler_params=pltpu.CompilerParams(
            dimension_semantics=("parallel",)),         # megacore shard on v7x
        cost_estimate=cost,
    )(x, *weight_args)


# ---------------------------------------------------------------------------
# Params
# ---------------------------------------------------------------------------
def init_params(key, num_inputs, H):
    """Deterministic init mimicking PyTorch nn.Linear default (U[-1/sqrt(fan_in), +])."""
    ks = jax.random.split(key, 8)

    def lin(kw, kb, fan_in, fan_out):
        bound = 1.0 / jnp.sqrt(fan_in)
        # weight stored as [in, out] (transpose of PyTorch's [out, in])
        w = jax.random.uniform(kw, (fan_in, fan_out), jnp.float32, -bound, bound)
        b = jax.random.uniform(kb, (1, fan_out), jnp.float32, -bound, bound)
        return w, b

    w1, b1 = lin(ks[0], ks[1], num_inputs, H)   # fc1
    wg, bg = lin(ks[2], ks[3], num_inputs, H)   # fcG
    w2, b2 = lin(ks[4], ks[5], H, H)            # fc2
    w4, b4 = lin(ks[6], ks[7], H, 2)            # fc4
    return dict(w1=w1, b1=b1, wg=wg, bg=bg, w2=w2, b2=b2, w4=w4, b4=b4)


def pack_params(p):
    """Fuse fc1|fcG along the output axis and cast matmul weights to bf16."""
    w1g = jnp.concatenate([p["w1"], p["wg"]], axis=1).astype(jnp.bfloat16)  # [D, 2H]
    b1g = jnp.concatenate([p["b1"], p["bg"]], axis=1).astype(jnp.float32)   # [1, 2H]
    return dict(
        w1g=w1g, b1g=b1g,
        w2=p["w2"].astype(jnp.bfloat16), b2=p["b2"].astype(jnp.float32),
        w4=p["w4"].astype(jnp.bfloat16), b4=p["b4"].astype(jnp.float32),
    )


def reference_forward(x, p):
    """Pure-JAX f32 reference mirroring the PyTorch forward, for verification."""
    h1 = jnp.maximum(x @ p["w1"] + p["b1"], 0.0)
    h2 = jnp.maximum(h1 @ p["w2"] + p["b2"], 0.0)
    g = jax.nn.sigmoid(x @ p["wg"] + p["bg"])
    return 1.0 * ((g * h2) @ p["w4"] + p["b4"])


# ---------------------------------------------------------------------------
if __name__ == "__main__":
    B, NUM_INPUTS, H = 8, 16, 32

    key = jax.random.PRNGKey(0)
    k_x, k_p = jax.random.split(key)
    x = jax.random.normal(k_x, (B, NUM_INPUTS), jnp.float32)
    params = init_params(k_p, NUM_INPUTS, H)
    packed = pack_params(params)

    out = neural_network_model(x, packed)
    out = jax.block_until_ready(out)

    ref = jax.block_until_ready(reference_forward(x, params))
    assert out.shape == (B, 2)
    # bf16 matmul inputs with f32 accumulation -> loosened tolerance vs f32 ref.
    assert jnp.allclose(out, ref, atol=5e-2, rtol=5e-2), (out, ref)

    print("KERNEL_OK")
</pallas_src>

<mosaic_0001>
module attributes {stable_mosaic.version = 11 : i64} {
  func.func @_mlp_kernel(%arg0: i32, %arg1: memref<8x16xf32, #tpu.memory_space<vmem>>, %arg2: memref<16x64xbf16, #tpu.memory_space<vmem>>, %arg3: memref<1x64xf32, #tpu.memory_space<vmem>>, %arg4: memref<32x32xbf16, #tpu.memory_space<vmem>>, %arg5: memref<1x32xf32, #tpu.memory_space<vmem>>, %arg6: memref<32x2xbf16, #tpu.memory_space<vmem>>, %arg7: memref<1x2xf32, #tpu.memory_space<vmem>>, %arg8: memref<8x2xf32, #tpu.memory_space<vmem>>) attributes {dimension_semantics = [#tpu.dimension_semantics<parallel>], iteration_bounds = array<i64: 1>, scalar_prefetch = 0 : i64, scratch_operands = 0 : i64, tpu.core_type = #tpu.core_type<tc>, window_params = [{transform_indices = @transform_0, window_bounds = array<i64: 8, 16>}, {pipeline_mode = #tpu.pipeline_mode<synchronous>, transform_indices = @transform_1, window_bounds = array<i64: 16, 64>}, {pipeline_mode = #tpu.pipeline_mode<synchronous>, transform_indices = @transform_2, window_bounds = array<i64: 1, 64>}, {pipeline_mode = #tpu.pipeline_mode<synchronous>, transform_indices = @transform_3, window_bounds = array<i64: 32, 32>}, {pipeline_mode = #tpu.pipeline_mode<synchronous>, transform_indices = @transform_4, window_bounds = array<i64: 1, 32>}, {pipeline_mode = #tpu.pipeline_mode<synchronous>, transform_indices = @transform_5, window_bounds = array<i64: 32, 2>}, {pipeline_mode = #tpu.pipeline_mode<synchronous>, transform_indices = @transform_6, window_bounds = array<i64: 1, 2>}, {transform_indices = @transform_7, window_bounds = array<i64: 8, 2>}]} {
    %c0 = arith.constant 0 : index
    %c0_0 = arith.constant 0 : index
    %0 = vector.load %arg1[%c0, %c0_0] : memref<8x16xf32, #tpu.memory_space<vmem>>, vector<8x16xf32>
    %1 = arith.truncf %0 : vector<8x16xf32> to vector<8x16xbf16>
    %c0_1 = arith.constant 0 : index
    %c0_2 = arith.constant 0 : index
    %2 = vector.load %arg2[%c0_1, %c0_2] : memref<16x64xbf16, #tpu.memory_space<vmem>>, vector<16x64xbf16>
    %cst = arith.constant dense<0.000000e+00> : vector<8x64xf32>
    %3 = tpu.matmul %1, %2, %cst {dimension_numbers = #tpu.dot_dimension_numbers<[1], [0], [0], [1], [0, 0, 1, 1], [], []>} : vector<8x16xbf16>, vector<16x64xbf16>, vector<8x64xf32> -> vector<8x64xf32>
    %c0_3 = arith.constant 0 : index
    %c0_4 = arith.constant 0 : index
    %4 = vector.load %arg3[%c0_3, %c0_4] : memref<1x64xf32, #tpu.memory_space<vmem>>, vector<1x64xf32>
    %5 = vector.broadcast %4 : vector<1x64xf32> to vector<8x64xf32>
    %6 = arith.addf %3, %5 : vector<8x64xf32>
    %7 = vector.extract_strided_slice %6 {offsets = [0, 0], sizes = [8, 32], strides = [1, 1]} : vector<8x64xf32> to vector<8x32xf32>
    %8 = vector.extract_strided_slice %6 {offsets = [0, 32], sizes = [8, 32], strides = [1, 1]} : vector<8x64xf32> to vector<8x32xf32>
    %cst_5 = arith.constant 0.000000e+00 : f32
    %9 = vector.broadcast %cst_5 : f32 to vector<8x32xf32>
    %10 = arith.maximumf %7, %9 : vector<8x32xf32>
    %11 = arith.negf %8 : vector<8x32xf32>
    %12 = math.exp %11 : vector<8x32xf32>
    %cst_6 = arith.constant 1.000000e+00 : f32
    %13 = vector.broadcast %cst_6 : f32 to vector<8x32xf32>
    %14 = arith.addf %13, %12 : vector<8x32xf32>
    %15 = arith.divf %13, %14 : vector<8x32xf32>
    %16 = arith.truncf %10 : vector<8x32xf32> to vector<8x32xbf16>
    %c0_7 = arith.constant 0 : index
    %c0_8 = arith.constant 0 : index
    %17 = vector.load %arg4[%c0_7, %c0_8] : memref<32x32xbf16, #tpu.memory_space<vmem>>, vector<32x32xbf16>
    %cst_9 = arith.constant dense<0.000000e+00> : vector<8x32xf32>
    %18 = tpu.matmul %16, %17, %cst_9 {dimension_numbers = #tpu.dot_dimension_numbers<[1], [0], [0], [1], [0, 0, 1, 1], [], []>} : vector<8x32xbf16>, vector<32x32xbf16>, vector<8x32xf32> -> vector<8x32xf32>
    %c0_10 = arith.constant 0 : index
    %c0_11 = arith.constant 0 : index
    %19 = vector.load %arg5[%c0_10, %c0_11] : memref<1x32xf32, #tpu.memory_space<vmem>>, vector<1x32xf32>
    %20 = vector.broadcast %19 : vector<1x32xf32> to vector<8x32xf32>
    %21 = arith.addf %18, %20 : vector<8x32xf32>
    %cst_12 = arith.constant 0.000000e+00 : f32
    %22 = vector.broadcast %cst_12 : f32 to vector<8x32xf32>
    %23 = arith.maximumf %21, %22 : vector<8x32xf32>
    %24 = arith.mulf %15, %23 : vector<8x32xf32>
    %25 = arith.truncf %24 : vector<8x32xf32> to vector<8x32xbf16>
    %c0_13 = arith.constant 0 : index
    %c0_14 = arith.constant 0 : index
    %26 = vector.load %arg6[%c0_13, %c0_14] : memref<32x2xbf16, #tpu.memory_space<vmem>>, vector<32x2xbf16>
    %cst_15 = arith.constant dense<0.000000e+00> : vector<8x2xf32>
    %27 = tpu.matmul %25, %26, %cst_15 {dimension_numbers = #tpu.dot_dimension_numbers<[1], [0], [0], [1], [0, 0, 1, 1], [], []>} : vector<8x32xbf16>, vector<32x2xbf16>, vector<8x2xf32> -> vector<8x2xf32>
    %c0_16 = arith.constant 0 : index
    %c0_17 = arith.constant 0 : index
    %28 = vector.load %arg7[%c0_16, %c0_17] : memref<1x2xf32, #tpu.memory_space<vmem>>, vector<1x2xf32>
    %29 = vector.broadcast %28 : vector<1x2xf32> to vector<8x2xf32>
    %30 = arith.addf %27, %29 : vector<8x2xf32>
    %cst_18 = arith.constant 1.000000e+00 : f32
    %31 = vector.broadcast %cst_18 : f32 to vector<8x2xf32>
    %32 = arith.mulf %31, %30 : vector<8x2xf32>
    %c0_19 = arith.constant 0 : index
    %c0_20 = arith.constant 0 : index
    %33 = vector.load %arg8[%c0_19, %c0_20] : memref<8x2xf32, #tpu.memory_space<vmem>>, vector<8x2xf32>
    tpu.vector_store %arg8[%c0_19, %c0_20], %32 {strides = array<i32>} : memref<8x2xf32, #tpu.memory_space<vmem>>, vector<8x2xf32>,
    return
  }
  func.func @transform_0(%arg0: i32) -> (i32, i32) {
    %c0_i32 = arith.constant 0 : i32
    %c0_i32_0 = arith.constant 0 : i32
    return %arg0, %c0_i32 : i32, i32
  }
  func.func @transform_1(%arg0: i32) -> (i32, i32) {
    %c0_i32 = arith.constant 0 : i32
    %c0_i32_0 = arith.constant 0 : i32
    %c0_i32_1 = arith.constant 0 : i32
    return %c0_i32, %c0_i32_0 : i32, i32
  }
  func.func @transform_2(%arg0: i32) -> (i32, i32) {
    %c0_i32 = arith.constant 0 : i32
    %c0_i32_0 = arith.constant 0 : i32
    %c0_i32_1 = arith.constant 0 : i32
    return %c0_i32, %c0_i32_0 : i32, i32
  }
  func.func @transform_3(%arg0: i32) -> (i32, i32) {
    %c0_i32 = arith.constant 0 : i32
    %c0_i32_0 = arith.constant 0 : i32
    %c0_i32_1 = arith.constant 0 : i32
    return %c0_i32, %c0_i32_0 : i32, i32
  }
  func.func @transform_4(%arg0: i32) -> (i32, i32) {
    %c0_i32 = arith.constant 0 : i32
    %c0_i32_0 = arith.constant 0 : i32
    %c0_i32_1 = arith.constant 0 : i32
    return %c0_i32, %c0_i32_0 : i32, i32
  }
  func.func @transform_5(%arg0: i32) -> (i32, i32) {
    %c0_i32 = arith.constant 0 : i32
    %c0_i32_0 = arith.constant 0 : i32
    %c0_i32_1 = arith.constant 0 : i32
    return %c0_i32, %c0_i32_0 : i32, i32
  }
  func.func @transform_6(%arg0: i32) -> (i32, i32) {
    %c0_i32 = arith.constant 0 : i32
    %c0_i32_0 = arith.constant 0 : i32
    %c0_i32_1 = arith.constant 0 : i32
    return %c0_i32, %c0_i32_0 : i32, i32
  }
  func.func @transform_7(%arg0: i32) -> (i32, i32) {
    %c0_i32 = arith.constant 0 : i32
    %c0_i32_0 = arith.constant 0 : i32
    return %arg0, %c0_i32 : i32, i32
  }
}

</mosaic_0001>

<llo_original>
// kernel: tpu_custom_call.1
$region0: #{tpu_custom_call.1}
  #allocation0 [shape = 'u32[]', space=smem, size = 0x4, offset = 0x4, fixed_abs, tag = 'smem constant byte address 0x4 - core index']
  #allocation1 [shape = 'u32[144,128]{1,0:T(1,128)}', space=vmem, size = 0x12000, scoped, tag = 'internal scratch']
  %s0 = inlined_call_operand.hbm [shape: f32[8,16], index: 0, kind: input, shape index: {}]
  %s1 = inlined_call_operand.hbm [shape: bf16[16,64], index: 1, kind: input, shape index: {}]
  %s2 = inlined_call_operand.vmem [shape: f32[1,64], index: 2, kind: input, shape index: {}]
  %s3 = inlined_call_operand.vmem [shape: bf16[32,32], index: 3, kind: input, shape index: {}]
  %s4 = inlined_call_operand.vmem [shape: f32[1,32], index: 4, kind: input, shape index: {}]
  %s5 = inlined_call_operand.vmem [shape: bf16[32,2], index: 5, kind: input, shape index: {}]
  %s6 = inlined_call_operand.vmem [shape: f32[1,2], index: 6, kind: input, shape index: {}]
  %s7 = inlined_call_operand.vmem [shape: f32[8,2], index: 7, kind: output, shape index: {}]
  %s8 = sld [smem:[#allocation0]]
  $region46: #{tpu_custom_call.1} parent=0
    _
  %s10 = ssub.s32 1, %s8
  %s11 = scalar_select 0, %s10, %s8
  $region1: #{tpu_custom_call.1} parent=0
    #allocation2 [shape = 'u8[4096]{0}', space=vmem, size = 0x1000, scoped, tag = 'input window, operand 0, single buffered']
    #allocation3 [shape = 's32[1]{0}', space=sflag, size = 0x4, scoped, tag = 'scoped memory for tpu_custom_call.1']
    #allocation4 [shape = 'u8[4096]{0}', space=vmem, size = 0x1000, scoped, tag = 'input window, operand 1, single buffered']
    #allocation5 [shape = 's32[1]{0}', space=sflag, size = 0x4, scoped, tag = 'scoped memory for tpu_custom_call.1']
    %12 = vsyncpa [#allocation3], 0
    %13 = vsyncpa [#allocation5], 0
    // Predicated region
    $region2: #{tpu_custom_call.1} parent=1 // pred_check
      _
    $region3: #{tpu_custom_call.1} parent=1 // pred_check_branch
      %15 = sbr.rel (0) target = $region5
    $region4: #{tpu_custom_call.1} parent=1 // pred_region
      %s17 = ssub.s32 128, 128
      %18 = vsyncadd [#allocation3], %s17
      %s20 = sshll.u32 [#allocation2], 4
      %s21 = int_to_ptr.vmem [resolvable:$true] %s20
      %23 = dma.hbm_to_vmem [thread:$0]  %s0, 128, %s21, [#allocation3]
    $region5: #{tpu_custom_call.1} parent=1 // pred_fallthru
      _
    // Predicated region
    $region6: #{tpu_custom_call.1} parent=1 // pred_check
      _
    $region7: #{tpu_custom_call.1} parent=1 // pred_check_branch
      %25 = sbr.rel (0) target = $region9
    $region8: #{tpu_custom_call.1} parent=1 // pred_region
      %s27 = ssub.s32 128, 128
      %28 = vsyncadd [#allocation5], %s27
      %s29 = sshll.u32 [#allocation4], 4
      %s30 = int_to_ptr.vmem [resolvable:$true] %s29
      %35 = dma.hbm_to_vmem [thread:$0]  %s1, 128, %s30, [#allocation5], 64, 64, 4
    $region9: #{tpu_custom_call.1} parent=1 // pred_fallthru
      _
    // Predicated region
    $region10: #{tpu_custom_call.1} parent=1 // pred_check
      _
    $region11: #{tpu_custom_call.1} parent=1 // pred_check_branch
      %37 = sbr.rel (0) target = $region13
    $region12: #{tpu_custom_call.1} parent=1 // pred_region
      _
    $region13: #{tpu_custom_call.1} parent=1 // pred_fallthru
      _
    // Predicated region
    $region14: #{tpu_custom_call.1} parent=1 // pred_check
      _
    $region15: #{tpu_custom_call.1} parent=1 // pred_check_branch
      %39 = sbr.rel (0) target = $region17
    $region16: #{tpu_custom_call.1} parent=1 // pred_region
      _
    $region17: #{tpu_custom_call.1} parent=1 // pred_fallthru
      _
    // Predicated region
    $region18: #{tpu_custom_call.1} parent=1 // pred_check
      _
    $region19: #{tpu_custom_call.1} parent=1 // pred_check_branch
      %41 = sbr.rel (0) target = $region21
    $region20: #{tpu_custom_call.1} parent=1 // pred_region
      _
    $region21: #{tpu_custom_call.1} parent=1 // pred_fallthru
      _
    // Predicated region
    $region22: #{tpu_custom_call.1} parent=1 // pred_check
      _
    $region23: #{tpu_custom_call.1} parent=1 // pred_check_branch
      %43 = sbr.rel (0) target = $region25
    $region24: #{tpu_custom_call.1} parent=1 // pred_region
      _
    $region25: #{tpu_custom_call.1} parent=1 // pred_fallthru
      _
    // Predicated region
    $region26: #{tpu_custom_call.1} parent=1 // pred_check
      _
    $region27: #{tpu_custom_call.1} parent=1 // pred_check_branch
      %45 = sbr.rel (0) target = $region29
    $region28: #{tpu_custom_call.1} parent=1 // pred_region
      _
    $region29: #{tpu_custom_call.1} parent=1 // pred_fallthru
      _
    // Predicated region
    $region30: #{tpu_custom_call.1} parent=1 // pred_check
      _
    $region31: #{tpu_custom_call.1} parent=1 // pred_check_branch
      %47 = sbr.rel (0) target = $region33
    $region32: #{tpu_custom_call.1} parent=1 // pred_region
      %48 = dma.done [#allocation3], 128
    $region33: #{tpu_custom_call.1} parent=1 // pred_fallthru
      _
    // Predicated region
    $region34: #{tpu_custom_call.1} parent=1 // pred_check
      _
    $region35: #{tpu_custom_call.1} parent=1 // pred_check_branch
      %50 = sbr.rel (0) target = $region37
    $region36: #{tpu_custom_call.1} parent=1 // pred_region
      %51 = dma.done [#allocation5], 128
    $region37: #{tpu_custom_call.1} parent=1 // pred_fallthru
      _
    %v53 = vld [vmem:[#allocation2] sm:$0xff]
    %v54 = vpack.c.bf16 %v53, %v53
    %v55 = vld [vmem:[#allocation4] sm:$0xf]
    %v56 = vld [vmem:[#allocation4 + $0x4] sm:$0xf]
    %v57 = vld [vmem:[%s2] sm:$0x1]
    %v59 = vlaneseq
    %v60 = vshrl.u32 %v59, 7
    %v61 = vsub.s32 0, %v60
    %v62 = vrot.slane %v57, %v61
    %v66 = vunpack.c.l.b16 %v55
    %v67 = vunpack.c.l.b16 %v56
    %v68 = vpack.c.b16 %v67, %v66
    %vm70 = vcmask 130048
    %v72 = vsel %vm70, %v54, 0
    %74 = vmatprep.subr.bf16.mxu0 0
    %75 = vmatpush1.bf16.msra.mxu0 0
    %76 = vmatprep.subr.bf16.mxu0 0
    %77 = vmatpush1.bf16.msra.mxu0 0
    %78 = vmatprep.subr.bf16.mxu0 0
    %79 = vmatpush1.bf16.msra.mxu0 0
    %80 = vmatprep.subr.bf16.mxu0 0
    %81 = vmatpush1.bf16.msra.mxu0 0
    %82 = vmatprep.subr.bf16.mxu0 0
    %83 = vmatpush1.bf16.msra.mxu0 0
    %84 = vmatprep.subr.bf16.mxu0 0
    %85 = vmatpush1.bf16.msra.mxu0 0
    %86 = vmatprep.subr.bf16.mxu0 0
    %87 = vmatpush1.bf16.msra.mxu0 0
    %88 = vmatprep.subr.bf16.mxu0 0
    %89 = vmatpush1.bf16.msra.mxu0 %v68
    %90 = vmatprep.subr.bf16.mxu0 0
    %91 = vmatpush2.bf16.msra.mxu0 0
    %92 = vmatprep.subr.bf16.mxu0 0
    %93 = vmatpush2.bf16.msra.mxu0 0
    %94 = vmatprep.subr.bf16.mxu0 0
    %95 = vmatpush2.bf16.msra.mxu0 0
    %96 = vmatprep.subr.bf16.mxu0 0
    %97 = vmatpush2.bf16.msra.mxu0 0
    %98 = vmatprep.subr.bf16.mxu0 0
    %99 = vmatpush2.bf16.msra.mxu0 0
    %100 = vmatprep.subr.bf16.mxu0 0
    %101 = vmatpush2.bf16.msra.mxu0 0
    %102 = vmatprep.subr.bf16.mxu0 0
    %103 = vmatpush2.bf16.msra.mxu0 0
    %104 = vmatprep.subr.bf16.mxu0 0
    %105 = vmatpush2.bf16.msra.mxu0 0
    %106 = vmatprep.mubr.bf16.mxu0 0
    %107 = vmatmul.mubr.bf16.gmra.mxu0 %v72
    %v108 = vpop.f32.mrf.mxu0
    %v109 = vadd.f32 %v62, %v108
    %v110 = vpop.f32.mrf.mxu0
    %v111 = vpop.f32.mrf.mxu0
    %v112 = vpop.f32.mrf.mxu0
    %113 = vdwg.mxu0
    %v114 = vmax.f32 %v109, 0.0
    %v115 = vxor.u32 %v109, 2147483648
    %v116 = vmul.f32 %v115, 1.442695
    %v117 = vpow.pop %v116
    %v118 = vadd.f32 %v117, 1.0
    %v119 = vrcp.pop %v118
    %v120 = vmul.f32 1.0, %v119
    %v121 = vpack.c.bf16 %v114, %v114
    %v122 = vld [vmem:[%s3] sm:$0xf]
    %v123 = vld [vmem:[%s3 + $0x4] sm:$0xf]
    %v124 = vld [vmem:[%s3 + $0x8] sm:$0xf]
    %v125 = vld [vmem:[%s3 + $0xc] sm:$0xf]
    %v126 = vld [vmem:[%s4] sm:$0x1]
    %v128 = vlaneseq
    %v129 = vshrl.u32 %v128, 7
    %v130 = vsub.s32 0, %v129
    %v131 = vrot.slane %v126, %v130
    %v137 = vunpack.c.l.b16 %v122
    %v138 = vunpack.c.l.b16 %v123
    %v139 = vunpack.c.l.b16 %v124
    %v140 = vunpack.c.l.b16 %v125
    %v141 = vpack.c.b16 %v138, %v137
    %v142 = vpack.c.b16 %v140, %v139
    %vm145 = vcmask 261120
    %v147 = vsel %vm145, %v121, 0
    %149 = vmatprep.subr.bf16.mxu0 0
    %150 = vmatpush1.bf16.msra.mxu0 0
    %151 = vmatprep.subr.bf16.mxu0 0
    %152 = vmatpush1.bf16.msra.mxu0 0
    %153 = vmatprep.subr.bf16.mxu0 0
    %154 = vmatpush1.bf16.msra.mxu0 0
    %155 = vmatprep.subr.bf16.mxu0 0
    %156 = vmatpush1.bf16.msra.mxu0 0
    %157 = vmatprep.subr.bf16.mxu0 0
    %158 = vmatpush1.bf16.msra.mxu0 0
    %159 = vmatprep.subr.bf16.mxu0 0
    %160 = vmatpush1.bf16.msra.mxu0 0
    %161 = vmatprep.subr.bf16.mxu0 0
    %162 = vmatpush1.bf16.msra.mxu0 %v142
    %163 = vmatprep.subr.bf16.mxu0 0
    %164 = vmatpush1.bf16.msra.mxu0 %v141
    %165 = vmatprep.subr.bf16.mxu0 0
    %166 = vmatpush2.bf16.msra.mxu0 0
    %167 = vmatprep.subr.bf16.mxu0 0
    %168 = vmatpush2.bf16.msra.mxu0 0
    %169 = vmatprep.subr.bf16.mxu0 0
    %170 = vmatpush2.bf16.msra.mxu0 0
    %171 = vmatprep.subr.bf16.mxu0 0
    %172 = vmatpush2.bf16.msra.mxu0 0
    %173 = vmatprep.subr.bf16.mxu0 0
    %174 = vmatpush2.bf16.msra.mxu0 0
    %175 = vmatprep.subr.bf16.mxu0 0
    %176 = vmatpush2.bf16.msra.mxu0 0
    %177 = vmatprep.subr.bf16.mxu0 0
    %178 = vmatpush2.bf16.msra.mxu0 0
    %179 = vmatprep.subr.bf16.mxu0 0
    %180 = vmatpush2.bf16.msra.mxu0 0
    %181 = vmatprep.mubr.bf16.mxu0 0
    %182 = vmatmul.mubr.bf16.gmra.mxu0 %v147
    %v183 = vpop.f32.mrf.mxu0
    %v184 = vadd.f32 %v131, %v183
    %v185 = vpop.f32.mrf.mxu0
    %v186 = vpop.f32.mrf.mxu0
    %v187 = vpop.f32.mrf.mxu0
    %188 = vdwg.mxu0
    %v189 = vmax.f32 %v184, 0.0
    %191 = vrot.lane.b32.xlu0 %v189, 32
    %v192 = vpop.permute.xlu0 %191
    %v194 = vmul.f32 %v120, %v192
    %v195 = vpack.c.bf16 %v194, %v194
    %v196 = vld [vmem:[%s5] sm:$0xf]
    %v197 = vld [vmem:[%s5 + $0x4] sm:$0xf]
    %v198 = vld [vmem:[%s5 + $0x8] sm:$0xf]
    %v199 = vld [vmem:[%s5 + $0xc] sm:$0xf]
    %v200 = vld [vmem:[%s6] sm:$0x1]
    %v202 = vlaneseq
    %v203 = vshrl.u32 %v202, 7
    %v204 = vsub.s32 0, %v203
    %v205 = vrot.slane %v200, %v204
    %208 = vrot.lane.b32.xlu0 %v195, 96
    %v209 = vpop.permute.xlu0 %208
    %v214 = vunpack.c.l.b16 %v196
    %v215 = vunpack.c.l.b16 %v197
    %v216 = vunpack.c.l.b16 %v198
    %v217 = vunpack.c.l.b16 %v199
    %v218 = vpack.c.b16 %v215, %v214
    %v219 = vpack.c.b16 %v217, %v216
    %v223 = vsel %vm145, %v209, 0
    %225 = vmatprep.subr.bf16.mxu0 0
    %226 = vmatpush1.bf16.msra.mxu0 0
    %227 = vmatprep.subr.bf16.mxu0 0
    %228 = vmatpush1.bf16.msra.mxu0 0
    %229 = vmatprep.subr.bf16.mxu0 0
    %230 = vmatpush1.bf16.msra.mxu0 0
    %231 = vmatprep.subr.bf16.mxu0 0
    %232 = vmatpush1.bf16.msra.mxu0 0
    %233 = vmatprep.subr.bf16.mxu0 0
    %234 = vmatpush1.bf16.msra.mxu0 0
    %235 = vmatprep.subr.bf16.mxu0 0
    %236 = vmatpush1.bf16.msra.mxu0 0
    %237 = vmatprep.subr.bf16.mxu0 0
    %238 = vmatpush1.bf16.msra.mxu0 %v219
    %239 = vmatprep.subr.bf16.mxu0 0
    %240 = vmatpush1.bf16.msra.mxu0 %v218
    %241 = vmatprep.subr.bf16.mxu0 0
    %242 = vmatpush2.bf16.msra.mxu0 0
    %243 = vmatprep.subr.bf16.mxu0 0
    %244 = vmatpush2.bf16.msra.mxu0 0
    %245 = vmatprep.subr.bf16.mxu0 0
    %246 = vmatpush2.bf16.msra.mxu0 0
    %247 = vmatprep.subr.bf16.mxu0 0
    %248 = vmatpush2.bf16.msra.mxu0 0
    %249 = vmatprep.subr.bf16.mxu0 0
    %250 = vmatpush2.bf16.msra.mxu0 0
    %251 = vmatprep.subr.bf16.mxu0 0
    %252 = vmatpush2.bf16.msra.mxu0 0
    %253 = vmatprep.subr.bf16.mxu0 0
    %254 = vmatpush2.bf16.msra.mxu0 0
    %255 = vmatprep.subr.bf16.mxu0 0
    %256 = vmatpush2.bf16.msra.mxu0 0
    %257 = vmatprep.mubr.bf16.mxu0 0
    %258 = vmatmul.mubr.bf16.gmra.mxu0 %v223
    %v259 = vpop.f32.mrf.mxu0
    %v260 = vadd.f32 %v205, %v259
    %v261 = vpop.f32.mrf.mxu0
    %v262 = vpop.f32.mrf.mxu0
    %v263 = vpop.f32.mrf.mxu0
    %264 = vdwg.mxu0
    %vm265 = vcmask 15360
    %266 = vst.msk [vmem:[%s7] sm:$0xff] %vm265, %v260
    // Predicated region
    $region38: #{tpu_custom_call.1} parent=1 // pred_check
      _
    $region39: #{tpu_custom_call.1} parent=1 // pred_check_branch
      %268 = sbr.rel (0) target = $region41
    $region40: #{tpu_custom_call.1} parent=1 // pred_region
      _
    $region41: #{tpu_custom_call.1} parent=1 // pred_fallthru
      _
    // Predicated region
    $region42: #{tpu_custom_call.1} parent=1 // pred_check
      _
    $region43: #{tpu_custom_call.1} parent=1 // pred_check_branch
      %270 = sbr.rel (0) target = $region45
    $region44: #{tpu_custom_call.1} parent=1 // pred_region
      _
    $region45: #{tpu_custom_call.1} parent=1 // pred_fallthru
      _
    %271 = vsyncpa [#allocation3], 1
    %272 = vsyncpa [#allocation5], 1

</llo_original>
